<compile_context>
chip_gen: v7x
topology: tpu7x:2x2x1
jax: 0.10.0
libtpu: 0.0.40
codegen_flags: <defaults>
</compile_context>

<pallas_src>
from math import sqrt

import jax
import jax.numpy as jnp
from jax.experimental import pallas as pl
from jax.experimental.pallas import tpu as pltpu

# ----------------------- model hyper-parameters (small) -----------------------
BATCH = 2
SEQ = 8
D_MODEL = 32          # input_size
HIDDEN = 64           # hidden_size of the FF
N_HEADS = 4
HEAD_DIM = D_MODEL // N_HEADS
LN_EPS = 1e-5
NEG_INF = -1e30


def _layernorm(h, gamma, beta):
    mu = jnp.mean(h, axis=-1, keepdims=True)
    var = jnp.mean((h - mu) ** 2, axis=-1, keepdims=True)
    return (h - mu) * jax.lax.rsqrt(var + LN_EPS) * gamma + beta


def _gelu_tanh(x):
    # GELU(approx_tanh=True)
    return 0.5 * x * (1.0 + jnp.tanh(0.7978845608028654 * (x + 0.044715 * x * x * x)))


def gpt_block_kernel(x_ref,
                     g1_ref, b1_ref,
                     wqkv_ref, bqkv_ref,
                     wo_ref, bo_ref,
                     g2_ref, b2_ref,
                     w1_ref, fb1_ref, w2_ref, fb2_ref,
                     hmask_ref, bias_ref, segsum_ref,
                     o_ref):
    x = x_ref[...]                                    # (R, D) = (16, 32)

    # ---- pre-LN 1 + fused QKV projection (one MXU push; Q scale pre-folded) ----
    h = _layernorm(x, g1_ref[...], b1_ref[...])
    qkv = jnp.dot(h, wqkv_ref[...], preferred_element_type=jnp.float32) + bqkv_ref[...]
    q = qkv[:, 0 * D_MODEL:1 * D_MODEL]               # (R, D), already * 1/sqrt(HD)
    k = qkv[:, 1 * D_MODEL:2 * D_MODEL]
    v = qkv[:, 2 * D_MODEL:3 * D_MODEL]

    # ---- all-head causal self-attention with block-diagonal head packing ----
    # Row group h of K_all / V_bd carries only head h's feature lanes, so a single
    # matmul against q / p produces every head's scores / outputs at once.
    hm = hmask_ref[...]                               # (H*R, D) precomputed 0/1 mask
    k_all = jnp.concatenate([k] * N_HEADS, axis=0) * hm    # (H*R, D)
    v_bd = jnp.concatenate([v] * N_HEADS, axis=0) * hm     # (H*R, D) block-diagonal V

    # One score matmul, contracting the last dims (no in-kernel transpose).
    scores = jax.lax.dot_general(q, k_all, (((1,), (1,)), ((), ())),
                                 preferred_element_type=jnp.float32)   # (R, H*R)
    scores = scores + bias_ref[...]                   # causal + same-batch additive bias

    # Segmented softmax over each head's R-lane group.  Subtracting the per-row
    # (all-head) max is exact for every group (same constant within a group) and
    # prevents overflow; masked entries are exp(-1e30 - m) -> 0.
    m = jnp.max(scores, axis=-1, keepdims=True)
    e = jnp.exp(scores - m)
    # Per-head denominator, broadcast back to its 16-lane group, in one MXU push.
    denom = jnp.dot(e, segsum_ref[...], preferred_element_type=jnp.float32)  # (R, H*R)
    p = e * pl.reciprocal(denom, approx=True)         # EUP reciprocal slot

    # One PV push yields the already-concatenated head output; one Wo push follows.
    head_out = jnp.dot(p, v_bd, preferred_element_type=jnp.float32)          # (R, D)
    attn = jnp.dot(head_out, wo_ref[...], preferred_element_type=jnp.float32) + bo_ref[...]

    x1 = x + attn                                     # residual 1

    # ---- pre-LN 2 + feed-forward (Linear -> GELU(tanh) -> Linear) ----
    h2 = _layernorm(x1, g2_ref[...], b2_ref[...])
    f = jnp.dot(h2, w1_ref[...], preferred_element_type=jnp.float32) + fb1_ref[...]
    f = _gelu_tanh(f)
    f = jnp.dot(f, w2_ref[...], preferred_element_type=jnp.float32) + fb2_ref[...]

    # D=32 => the store is lane-masked (32/128 lanes); repacking in-kernel would
    # cost more cross-lane relayout than the two masked stores it saves.
    o_ref[...] = x1 + f                               # residual 2
    # TODO(synk): dropout is identity here (dropout=0.0 / eval mode), so it is omitted.


def prepare_params(params, batch, seq):
    """One-time packing of weights + attention constants (hoisted out of the call)."""
    (g1, b1, wq, bq, wk, bk, wv, bv, wo, bo, g2, b2, w1, fb1, w2, fb2) = params
    scale = 1.0 / sqrt(HEAD_DIM)
    # Fused QKV projection with the score scale folded into the Q columns/bias.
    wqkv = jnp.concatenate([wq * scale, wk, wv], axis=1)      # (D, 3D)
    bqkv = jnp.concatenate([bq * scale, bk, bv], axis=1)      # (1, 3D)

    R = batch * seq
    HR = N_HEADS * R
    # Head-selection mask: row group h keeps only head h's feature lanes.
    headmask = (jnp.arange(HR)[:, None] // R ==
                jnp.arange(D_MODEL)[None, :] // HEAD_DIM).astype(jnp.float32)   # (HR, D)
    # Additive causal + same-batch bias over flattened rows, tiled across heads.
    row = jnp.arange(R)[:, None]
    col = jnp.arange(R)[None, :]
    allowed = (row // seq == col // seq) & (row >= col)
    bias = jnp.where(allowed, 0.0, NEG_INF).astype(jnp.float32)                 # (R, R)
    bias_t = jnp.tile(bias, (1, N_HEADS))                                       # (R, HR)
    # Block-ones matrix: e @ segsum = per-head softmax denominator broadcast back.
    a = jnp.arange(HR)
    segsum = (a[:, None] // R == a[None, :] // R).astype(jnp.float32)           # (HR, HR)

    return (g1, b1, wqkv, bqkv, wo, bo, g2, b2, w1, fb1, w2, fb2,
            headmask, bias_t, segsum)


def gpt_transformer_block(x, prepped):
    B, S, D = x.shape
    x2d = x.reshape(B * S, D)                         # row-major reshape: free in HBM

    in_specs = [pl.BlockSpec((B * S, D), lambda i: (0, 0))]
    for p in prepped:
        in_specs.append(pl.BlockSpec(p.shape, lambda i: (0, 0)))

    out2d = pl.pallas_call(
        gpt_block_kernel,
        out_shape=jax.ShapeDtypeStruct((B * S, D), jnp.float32),
        grid=(1,),                                    # single fused step over all B*S rows
        in_specs=in_specs,
        out_specs=pl.BlockSpec((B * S, D), lambda i: (0, 0)),
        compiler_params=pltpu.CompilerParams(dimension_semantics=("arbitrary",)),
    )(x2d, *prepped)
    return out2d.reshape(B, S, D)


# ------------------------- pure-JAX reference for checking -------------------------
def reference_block(x, params):
    (g1, b1, wq, bq, wk, bk, wv, bv, wo, bo, g2, b2, w1, fb1, w2, fb2) = params

    def ln(h, g, b):
        mu = jnp.mean(h, axis=-1, keepdims=True)
        var = jnp.mean((h - mu) ** 2, axis=-1, keepdims=True)
        return (h - mu) / jnp.sqrt(var + LN_EPS) * g + b

    h = ln(x, g1[0], b1[0])
    q = h @ wq + bq[0]
    k = h @ wk + bk[0]
    v = h @ wv + bv[0]
    B, S, D = x.shape
    qh = q.reshape(B, S, N_HEADS, HEAD_DIM).transpose(0, 2, 1, 3)
    kh = k.reshape(B, S, N_HEADS, HEAD_DIM).transpose(0, 2, 1, 3)
    vh = v.reshape(B, S, N_HEADS, HEAD_DIM).transpose(0, 2, 1, 3)
    scores = jnp.einsum("bhqd,bhkd->bhqk", qh, kh) / sqrt(HEAD_DIM)
    causal = jnp.tril(jnp.ones((S, S), dtype=bool))
    scores = jnp.where(causal, scores, NEG_INF)
    p = jax.nn.softmax(scores, axis=-1)
    attn = jnp.einsum("bhqk,bhkd->bhqd", p, vh).transpose(0, 2, 1, 3).reshape(B, S, D)
    attn = attn @ wo + bo[0]
    x1 = x + attn
    h2 = ln(x1, g2[0], b2[0])
    f = h2 @ w1 + fb1[0]
    f = 0.5 * f * (1.0 + jnp.tanh(0.7978845608028654 * (f + 0.044715 * f ** 3)))
    f = f @ w2 + fb2[0]
    return x1 + f


def make_params(key):
    ks = jax.random.split(key, 10)
    s = 0.02
    g1 = jnp.ones((1, D_MODEL), jnp.float32)
    b1 = jnp.zeros((1, D_MODEL), jnp.float32)
    wq = s * jax.random.normal(ks[0], (D_MODEL, D_MODEL), jnp.float32)
    bq = s * jax.random.normal(ks[1], (1, D_MODEL), jnp.float32)
    wk = s * jax.random.normal(ks[2], (D_MODEL, D_MODEL), jnp.float32)
    bk = s * jax.random.normal(ks[3], (1, D_MODEL), jnp.float32)
    wv = s * jax.random.normal(ks[4], (D_MODEL, D_MODEL), jnp.float32)
    bv = s * jax.random.normal(ks[5], (1, D_MODEL), jnp.float32)
    wo = s * jax.random.normal(ks[6], (D_MODEL, D_MODEL), jnp.float32)
    bo = jnp.zeros((1, D_MODEL), jnp.float32)
    g2 = jnp.ones((1, D_MODEL), jnp.float32)
    b2 = jnp.zeros((1, D_MODEL), jnp.float32)
    w1 = s * jax.random.normal(ks[7], (D_MODEL, HIDDEN), jnp.float32)
    fb1 = s * jax.random.normal(ks[8], (1, HIDDEN), jnp.float32)
    w2 = s * jax.random.normal(ks[9], (HIDDEN, D_MODEL), jnp.float32)
    fb2 = jnp.zeros((1, D_MODEL), jnp.float32)
    return (g1, b1, wq, bq, wk, bk, wv, bv, wo, bo, g2, b2, w1, fb1, w2, fb2)


if __name__ == "__main__":
    key = jax.random.PRNGKey(0)
    kx, kp = jax.random.split(key)
    x = jax.random.normal(kx, (BATCH, SEQ, D_MODEL), jnp.float32)
    params = make_params(kp)

    # One-time parameter / constant preparation (hoisted out of the per-call path).
    prepped = prepare_params(params, BATCH, SEQ)
    prepped = tuple(jax.block_until_ready(p) for p in prepped)

    fwd = jax.jit(gpt_transformer_block)
    out = jax.block_until_ready(fwd(x, prepped))

    ref = reference_block(x, params)
    assert out.shape == (BATCH, SEQ, D_MODEL)
    # Tolerance relaxed to 1e-3 because the softmax denominator uses the EUP
    # approximate reciprocal (pl.reciprocal approx=True), per the perf review.
    assert jnp.allclose(out, ref, atol=1e-3, rtol=1e-3), "mismatch vs reference"
    print("KERNEL_OK")
</pallas_src>

<mosaic_0001>
module attributes {stable_mosaic.version = 11 : i64} {
  func.func @gpt_block_kernel(%arg0: i32, %arg1: memref<16x32xf32, #tpu.memory_space<vmem>>, %arg2: memref<1x32xf32, #tpu.memory_space<vmem>>, %arg3: memref<1x32xf32, #tpu.memory_space<vmem>>, %arg4: memref<32x96xf32, #tpu.memory_space<vmem>>, %arg5: memref<1x96xf32, #tpu.memory_space<vmem>>, %arg6: memref<32x32xf32, #tpu.memory_space<vmem>>, %arg7: memref<1x32xf32, #tpu.memory_space<vmem>>, %arg8: memref<1x32xf32, #tpu.memory_space<vmem>>, %arg9: memref<1x32xf32, #tpu.memory_space<vmem>>, %arg10: memref<32x64xf32, #tpu.memory_space<vmem>>, %arg11: memref<1x64xf32, #tpu.memory_space<vmem>>, %arg12: memref<64x32xf32, #tpu.memory_space<vmem>>, %arg13: memref<1x32xf32, #tpu.memory_space<vmem>>, %arg14: memref<64x32xf32, #tpu.memory_space<vmem>>, %arg15: memref<16x64xf32, #tpu.memory_space<vmem>>, %arg16: memref<64x64xf32, #tpu.memory_space<vmem>>, %arg17: memref<16x32xf32, #tpu.memory_space<vmem>>) attributes {dimension_semantics = [#tpu.dimension_semantics<arbitrary>], iteration_bounds = array<i64: 1>, scalar_prefetch = 0 : i64, scratch_operands = 0 : i64, tpu.core_type = #tpu.core_type<tc>, window_params = [{pipeline_mode = #tpu.pipeline_mode<synchronous>, transform_indices = @transform_0, window_bounds = array<i64: 16, 32>}, {pipeline_mode = #tpu.pipeline_mode<synchronous>, transform_indices = @transform_1, window_bounds = array<i64: 1, 32>}, {pipeline_mode = #tpu.pipeline_mode<synchronous>, transform_indices = @transform_2, window_bounds = array<i64: 1, 32>}, {pipeline_mode = #tpu.pipeline_mode<synchronous>, transform_indices = @transform_3, window_bounds = array<i64: 32, 96>}, {pipeline_mode = #tpu.pipeline_mode<synchronous>, transform_indices = @transform_4, window_bounds = array<i64: 1, 96>}, {pipeline_mode = #tpu.pipeline_mode<synchronous>, transform_indices = @transform_5, window_bounds = array<i64: 32, 32>}, {pipeline_mode = #tpu.pipeline_mode<synchronous>, transform_indices = @transform_6, window_bounds = array<i64: 1, 32>}, {pipeline_mode = #tpu.pipeline_mode<synchronous>, transform_indices = @transform_7, window_bounds = array<i64: 1, 32>}, {pipeline_mode = #tpu.pipeline_mode<synchronous>, transform_indices = @transform_8, window_bounds = array<i64: 1, 32>}, {pipeline_mode = #tpu.pipeline_mode<synchronous>, transform_indices = @transform_9, window_bounds = array<i64: 32, 64>}, {pipeline_mode = #tpu.pipeline_mode<synchronous>, transform_indices = @transform_10, window_bounds = array<i64: 1, 64>}, {pipeline_mode = #tpu.pipeline_mode<synchronous>, transform_indices = @transform_11, window_bounds = array<i64: 64, 32>}, {pipeline_mode = #tpu.pipeline_mode<synchronous>, transform_indices = @transform_12, window_bounds = array<i64: 1, 32>}, {pipeline_mode = #tpu.pipeline_mode<synchronous>, transform_indices = @transform_13, window_bounds = array<i64: 64, 32>}, {pipeline_mode = #tpu.pipeline_mode<synchronous>, transform_indices = @transform_14, window_bounds = array<i64: 16, 64>}, {pipeline_mode = #tpu.pipeline_mode<synchronous>, transform_indices = @transform_15, window_bounds = array<i64: 64, 64>}, {pipeline_mode = #tpu.pipeline_mode<synchronous>, transform_indices = @transform_16, window_bounds = array<i64: 16, 32>}]} {
    %c0 = arith.constant 0 : index
    %c0_0 = arith.constant 0 : index
    %0 = vector.load %arg1[%c0, %c0_0] : memref<16x32xf32, #tpu.memory_space<vmem>>, vector<16x32xf32>
    %c0_1 = arith.constant 0 : index
    %c0_2 = arith.constant 0 : index
    %1 = vector.load %arg2[%c0_1, %c0_2] : memref<1x32xf32, #tpu.memory_space<vmem>>, vector<1x32xf32>
    %c0_3 = arith.constant 0 : index
    %c0_4 = arith.constant 0 : index
    %2 = vector.load %arg3[%c0_3, %c0_4] : memref<1x32xf32, #tpu.memory_space<vmem>>, vector<1x32xf32>
    %cst = arith.constant dense<0.000000e+00> : vector<16xf32>
    %3 = vector.multi_reduction <add>, %0, %cst [1] : vector<16x32xf32> to vector<16xf32>
    %4 = vector.shape_cast %3 : vector<16xf32> to vector<16x1xf32>
    %cst_5 = arith.constant 3.200000e+01 : f32
    %5 = vector.broadcast %cst_5 : f32 to vector<16x1xf32>
    %6 = arith.divf %4, %5 : vector<16x1xf32>
    %7 = vector.broadcast %6 : vector<16x1xf32> to vector<16x32xf32>
    %8 = arith.subf %0, %7 : vector<16x32xf32>
    %9 = arith.mulf %8, %8 : vector<16x32xf32>
    %cst_6 = arith.constant dense<0.000000e+00> : vector<16xf32>
    %10 = vector.multi_reduction <add>, %9, %cst_6 [1] : vector<16x32xf32> to vector<16xf32>
    %11 = vector.shape_cast %10 : vector<16xf32> to vector<16x1xf32>
    %cst_7 = arith.constant 3.200000e+01 : f32
    %12 = vector.broadcast %cst_7 : f32 to vector<16x1xf32>
    %13 = arith.divf %11, %12 : vector<16x1xf32>
    %14 = vector.broadcast %6 : vector<16x1xf32> to vector<16x32xf32>
    %15 = arith.subf %0, %14 : vector<16x32xf32>
    %cst_8 = arith.constant 9.99999974E-6 : f32
    %16 = vector.broadcast %cst_8 : f32 to vector<16x1xf32>
    %17 = arith.addf %13, %16 : vector<16x1xf32>
    %18 = math.rsqrt %17 : vector<16x1xf32>
    %19 = vector.broadcast %18 : vector<16x1xf32> to vector<16x32xf32>
    %20 = arith.mulf %15, %19 : vector<16x32xf32>
    %21 = vector.broadcast %1 : vector<1x32xf32> to vector<16x32xf32>
    %22 = arith.mulf %20, %21 : vector<16x32xf32>
    %23 = vector.broadcast %2 : vector<1x32xf32> to vector<16x32xf32>
    %24 = arith.addf %22, %23 : vector<16x32xf32>
    %c0_9 = arith.constant 0 : index
    %c0_10 = arith.constant 0 : index
    %25 = vector.load %arg4[%c0_9, %c0_10] : memref<32x96xf32, #tpu.memory_space<vmem>>, vector<32x96xf32>
    %cst_11 = arith.constant dense<0.000000e+00> : vector<16x96xf32>
    %26 = tpu.matmul %24, %25, %cst_11 {dimension_numbers = #tpu.dot_dimension_numbers<[1], [0], [0], [1], [0, 0, 1, 1], [], []>} : vector<16x32xf32>, vector<32x96xf32>, vector<16x96xf32> -> vector<16x96xf32>
    %c0_12 = arith.constant 0 : index
    %c0_13 = arith.constant 0 : index
    %27 = vector.load %arg5[%c0_12, %c0_13] : memref<1x96xf32, #tpu.memory_space<vmem>>, vector<1x96xf32>
    %28 = vector.broadcast %27 : vector<1x96xf32> to vector<16x96xf32>
    %29 = arith.addf %26, %28 : vector<16x96xf32>
    %30 = vector.extract_strided_slice %29 {offsets = [0, 0], sizes = [16, 32], strides = [1, 1]} : vector<16x96xf32> to vector<16x32xf32>
    %31 = vector.extract_strided_slice %29 {offsets = [0, 32], sizes = [16, 32], strides = [1, 1]} : vector<16x96xf32> to vector<16x32xf32>
    %32 = vector.extract_strided_slice %29 {offsets = [0, 64], sizes = [16, 32], strides = [1, 1]} : vector<16x96xf32> to vector<16x32xf32>
    %c0_14 = arith.constant 0 : index
    %c0_15 = arith.constant 0 : index
    %33 = vector.load %arg14[%c0_14, %c0_15] : memref<64x32xf32, #tpu.memory_space<vmem>>, vector<64x32xf32>
    %34 = tpu.concatenate %31, %31, %31, %31 in 0 : vector<16x32xf32>, vector<16x32xf32>, vector<16x32xf32>, vector<16x32xf32> -> vector<64x32xf32>
    %35 = arith.mulf %34, %33 : vector<64x32xf32>
    %36 = tpu.concatenate %32, %32, %32, %32 in 0 : vector<16x32xf32>, vector<16x32xf32>, vector<16x32xf32>, vector<16x32xf32> -> vector<64x32xf32>
    %37 = arith.mulf %36, %33 : vector<64x32xf32>
    %cst_16 = arith.constant dense<0.000000e+00> : vector<16x64xf32>
    %38 = tpu.matmul %30, %35, %cst_16 {dimension_numbers = #tpu.dot_dimension_numbers<[1], [1], [0], [0], [0, 0, 1, 0], [], []>} : vector<16x32xf32>, vector<64x32xf32>, vector<16x64xf32> -> vector<16x64xf32>
    %c0_17 = arith.constant 0 : index
    %c0_18 = arith.constant 0 : index
    %39 = vector.load %arg15[%c0_17, %c0_18] : memref<16x64xf32, #tpu.memory_space<vmem>>, vector<16x64xf32>
    %40 = arith.addf %38, %39 : vector<16x64xf32>
    %cst_19 = arith.constant dense<0xFF800000> : vector<16xf32>
    %41 = vector.multi_reduction <maximumf>, %40, %cst_19 [1] : vector<16x64xf32> to vector<16xf32>
    %42 = vector.shape_cast %41 : vector<16xf32> to vector<16x1xf32>
    %43 = vector.broadcast %42 : vector<16x1xf32> to vector<16x64xf32>
    %44 = arith.subf %40, %43 : vector<16x64xf32>
    %45 = math.exp %44 : vector<16x64xf32>
    %c0_20 = arith.constant 0 : index
    %c0_21 = arith.constant 0 : index
    %46 = vector.load %arg16[%c0_20, %c0_21] : memref<64x64xf32, #tpu.memory_space<vmem>>, vector<64x64xf32>
    %cst_22 = arith.constant dense<0.000000e+00> : vector<16x64xf32>
    %47 = tpu.matmul %45, %46, %cst_22 {dimension_numbers = #tpu.dot_dimension_numbers<[1], [0], [0], [1], [0, 0, 1, 1], [], []>} : vector<16x64xf32>, vector<64x64xf32>, vector<16x64xf32> -> vector<16x64xf32>
    %48 = tpu.reciprocal %47 {approx = true} : vector<16x64xf32> -> vector<16x64xf32>
    %49 = arith.mulf %45, %48 : vector<16x64xf32>
    %cst_23 = arith.constant dense<0.000000e+00> : vector<16x32xf32>
    %50 = tpu.matmul %49, %37, %cst_23 {dimension_numbers = #tpu.dot_dimension_numbers<[1], [0], [0], [1], [0, 0, 1, 1], [], []>} : vector<16x64xf32>, vector<64x32xf32>, vector<16x32xf32> -> vector<16x32xf32>
    %c0_24 = arith.constant 0 : index
    %c0_25 = arith.constant 0 : index
    %51 = vector.load %arg6[%c0_24, %c0_25] : memref<32x32xf32, #tpu.memory_space<vmem>>, vector<32x32xf32>
    %cst_26 = arith.constant dense<0.000000e+00> : vector<16x32xf32>
    %52 = tpu.matmul %50, %51, %cst_26 {dimension_numbers = #tpu.dot_dimension_numbers<[1], [0], [0], [1], [0, 0, 1, 1], [], []>} : vector<16x32xf32>, vector<32x32xf32>, vector<16x32xf32> -> vector<16x32xf32>
    %c0_27 = arith.constant 0 : index
    %c0_28 = arith.constant 0 : index
    %53 = vector.load %arg7[%c0_27, %c0_28] : memref<1x32xf32, #tpu.memory_space<vmem>>, vector<1x32xf32>
    %54 = vector.broadcast %53 : vector<1x32xf32> to vector<16x32xf32>
    %55 = arith.addf %52, %54 : vector<16x32xf32>
    %56 = arith.addf %0, %55 : vector<16x32xf32>
    %c0_29 = arith.constant 0 : index
    %c0_30 = arith.constant 0 : index
    %57 = vector.load %arg8[%c0_29, %c0_30] : memref<1x32xf32, #tpu.memory_space<vmem>>, vector<1x32xf32>
    %c0_31 = arith.constant 0 : index
    %c0_32 = arith.constant 0 : index
    %58 = vector.load %arg9[%c0_31, %c0_32] : memref<1x32xf32, #tpu.memory_space<vmem>>, vector<1x32xf32>
    %cst_33 = arith.constant dense<0.000000e+00> : vector<16xf32>
    %59 = vector.multi_reduction <add>, %56, %cst_33 [1] : vector<16x32xf32> to vector<16xf32>
    %60 = vector.shape_cast %59 : vector<16xf32> to vector<16x1xf32>
    %cst_34 = arith.constant 3.200000e+01 : f32
    %61 = vector.broadcast %cst_34 : f32 to vector<16x1xf32>
    %62 = arith.divf %60, %61 : vector<16x1xf32>
    %63 = vector.broadcast %62 : vector<16x1xf32> to vector<16x32xf32>
    %64 = arith.subf %56, %63 : vector<16x32xf32>
    %65 = arith.mulf %64, %64 : vector<16x32xf32>
    %cst_35 = arith.constant dense<0.000000e+00> : vector<16xf32>
    %66 = vector.multi_reduction <add>, %65, %cst_35 [1] : vector<16x32xf32> to vector<16xf32>
    %67 = vector.shape_cast %66 : vector<16xf32> to vector<16x1xf32>
    %cst_36 = arith.constant 3.200000e+01 : f32
    %68 = vector.broadcast %cst_36 : f32 to vector<16x1xf32>
    %69 = arith.divf %67, %68 : vector<16x1xf32>
    %70 = vector.broadcast %62 : vector<16x1xf32> to vector<16x32xf32>
    %71 = arith.subf %56, %70 : vector<16x32xf32>
    %cst_37 = arith.constant 9.99999974E-6 : f32
    %72 = vector.broadcast %cst_37 : f32 to vector<16x1xf32>
    %73 = arith.addf %69, %72 : vector<16x1xf32>
    %74 = math.rsqrt %73 : vector<16x1xf32>
    %75 = vector.broadcast %74 : vector<16x1xf32> to vector<16x32xf32>
    %76 = arith.mulf %71, %75 : vector<16x32xf32>
    %77 = vector.broadcast %57 : vector<1x32xf32> to vector<16x32xf32>
    %78 = arith.mulf %76, %77 : vector<16x32xf32>
    %79 = vector.broadcast %58 : vector<1x32xf32> to vector<16x32xf32>
    %80 = arith.addf %78, %79 : vector<16x32xf32>
    %c0_38 = arith.constant 0 : index
    %c0_39 = arith.constant 0 : index
    %81 = vector.load %arg10[%c0_38, %c0_39] : memref<32x64xf32, #tpu.memory_space<vmem>>, vector<32x64xf32>
    %cst_40 = arith.constant dense<0.000000e+00> : vector<16x64xf32>
    %82 = tpu.matmul %80, %81, %cst_40 {dimension_numbers = #tpu.dot_dimension_numbers<[1], [0], [0], [1], [0, 0, 1, 1], [], []>} : vector<16x32xf32>, vector<32x64xf32>, vector<16x64xf32> -> vector<16x64xf32>
    %c0_41 = arith.constant 0 : index
    %c0_42 = arith.constant 0 : index
    %83 = vector.load %arg11[%c0_41, %c0_42] : memref<1x64xf32, #tpu.memory_space<vmem>>, vector<1x64xf32>
    %84 = vector.broadcast %83 : vector<1x64xf32> to vector<16x64xf32>
    %85 = arith.addf %82, %84 : vector<16x64xf32>
    %cst_43 = arith.constant 5.000000e-01 : f32
    %86 = vector.broadcast %cst_43 : f32 to vector<16x64xf32>
    %87 = arith.mulf %86, %85 : vector<16x64xf32>
    %cst_44 = arith.constant 4.471500e-02 : f32
    %88 = vector.broadcast %cst_44 : f32 to vector<16x64xf32>
    %89 = arith.mulf %88, %85 : vector<16x64xf32>
    %90 = arith.mulf %89, %85 : vector<16x64xf32>
    %91 = arith.mulf %90, %85 : vector<16x64xf32>
    %92 = arith.addf %85, %91 : vector<16x64xf32>
    %cst_45 = arith.constant 0.797884583 : f32
    %93 = vector.broadcast %cst_45 : f32 to vector<16x64xf32>
    %94 = arith.mulf %93, %92 : vector<16x64xf32>
    %95 = math.tanh %94 : vector<16x64xf32>
    %cst_46 = arith.constant 1.000000e+00 : f32
    %96 = vector.broadcast %cst_46 : f32 to vector<16x64xf32>
    %97 = arith.addf %96, %95 : vector<16x64xf32>
    %98 = arith.mulf %87, %97 : vector<16x64xf32>
    %c0_47 = arith.constant 0 : index
    %c0_48 = arith.constant 0 : index
    %99 = vector.load %arg12[%c0_47, %c0_48] : memref<64x32xf32, #tpu.memory_space<vmem>>, vector<64x32xf32>
    %cst_49 = arith.constant dense<0.000000e+00> : vector<16x32xf32>
    %100 = tpu.matmul %98, %99, %cst_49 {dimension_numbers = #tpu.dot_dimension_numbers<[1], [0], [0], [1], [0, 0, 1, 1], [], []>} : vector<16x64xf32>, vector<64x32xf32>, vector<16x32xf32> -> vector<16x32xf32>
    %c0_50 = arith.constant 0 : index
    %c0_51 = arith.constant 0 : index
    %101 = vector.load %arg13[%c0_50, %c0_51] : memref<1x32xf32, #tpu.memory_space<vmem>>, vector<1x32xf32>
    %102 = vector.broadcast %101 : vector<1x32xf32> to vector<16x32xf32>
    %103 = arith.addf %100, %102 : vector<16x32xf32>
    %104 = arith.addf %56, %103 : vector<16x32xf32>
    %c0_52 = arith.constant 0 : index
    %c0_53 = arith.constant 0 : index
    %105 = vector.load %arg17[%c0_52, %c0_53] : memref<16x32xf32, #tpu.memory_space<vmem>>, vector<16x32xf32>
    tpu.vector_store %arg17[%c0_52, %c0_53], %104 {strides = array<i32>} : memref<16x32xf32, #tpu.memory_space<vmem>>, vector<16x32xf32>,
    return
  }
  func.func @transform_0(%arg0: i32) -> (i32, i32) {
    %c0_i32 = arith.constant 0 : i32
    %c0_i32_0 = arith.constant 0 : i32
    %c0_i32_1 = arith.constant 0 : i32
    return %c0_i32, %c0_i32_0 : i32, i32
  }
  func.func @transform_1(%arg0: i32) -> (i32, i32) {
    %c0_i32 = arith.constant 0 : i32
    %c0_i32_0 = arith.constant 0 : i32
    %c0_i32_1 = arith.constant 0 : i32
    return %c0_i32, %c0_i32_0 : i32, i32
  }
  func.func @transform_2(%arg0: i32) -> (i32, i32) {
    %c0_i32 = arith.constant 0 : i32
    %c0_i32_0 = arith.constant 0 : i32
    %c0_i32_1 = arith.constant 0 : i32
    return %c0_i32, %c0_i32_0 : i32, i32
  }
  func.func @transform_3(%arg0: i32) -> (i32, i32) {
    %c0_i32 = arith.constant 0 : i32
    %c0_i32_0 = arith.constant 0 : i32
    %c0_i32_1 = arith.constant 0 : i32
    return %c0_i32, %c0_i32_0 : i32, i32
  }
  func.func @transform_4(%arg0: i32) -> (i32, i32) {
    %c0_i32 = arith.constant 0 : i32
    %c0_i32_0 = arith.constant 0 : i32
    %c0_i32_1 = arith.constant 0 : i32
    return %c0_i32, %c0_i32_0 : i32, i32
  }
  func.func @transform_5(%arg0: i32) -> (i32, i32) {
    %c0_i32 = arith.constant 0 : i32
    %c0_i32_0 = arith.constant 0 : i32
    %c0_i32_1 = arith.constant 0 : i32
    return %c0_i32, %c0_i32_0 : i32, i32
  }
  func.func @transform_6(%arg0: i32) -> (i32, i32) {
    %c0_i32 = arith.constant 0 : i32
    %c0_i32_0 = arith.constant 0 : i32
    %c0_i32_1 = arith.constant 0 : i32
    return %c0_i32, %c0_i32_0 : i32, i32
  }
  func.func @transform_7(%arg0: i32) -> (i32, i32) {
    %c0_i32 = arith.constant 0 : i32
    %c0_i32_0 = arith.constant 0 : i32
    %c0_i32_1 = arith.constant 0 : i32
    return %c0_i32, %c0_i32_0 : i32, i32
  }
  func.func @transform_8(%arg0: i32) -> (i32, i32) {
    %c0_i32 = arith.constant 0 : i32
    %c0_i32_0 = arith.constant 0 : i32
    %c0_i32_1 = arith.constant 0 : i32
    return %c0_i32, %c0_i32_0 : i32, i32
  }
  func.func @transform_9(%arg0: i32) -> (i32, i32) {
    %c0_i32 = arith.constant 0 : i32
    %c0_i32_0 = arith.constant 0 : i32
    %c0_i32_1 = arith.constant 0 : i32
    return %c0_i32, %c0_i32_0 : i32, i32
  }
  func.func @transform_10(%arg0: i32) -> (i32, i32) {
    %c0_i32 = arith.constant 0 : i32
    %c0_i32_0 = arith.constant 0 : i32
    %c0_i32_1 = arith.constant 0 : i32
    return %c0_i32, %c0_i32_0 : i32, i32
  }
  func.func @transform_11(%arg0: i32) -> (i32, i32) {
    %c0_i32 = arith.constant 0 : i32
    %c0_i32_0 = arith.constant 0 : i32
    %c0_i32_1 = arith.constant 0 : i32
    return %c0_i32, %c0_i32_0 : i32, i32
  }
  func.func @transform_12(%arg0: i32) -> (i32, i32) {
    %c0_i32 = arith.constant 0 : i32
    %c0_i32_0 = arith.constant 0 : i32
    %c0_i32_1 = arith.constant 0 : i32
    return %c0_i32, %c0_i32_0 : i32, i32
  }
  func.func @transform_13(%arg0: i32) -> (i32, i32) {
    %c0_i32 = arith.constant 0 : i32
    %c0_i32_0 = arith.constant 0 : i32
    %c0_i32_1 = arith.constant 0 : i32
    return %c0_i32, %c0_i32_0 : i32, i32
  }
  func.func @transform_14(%arg0: i32) -> (i32, i32) {
    %c0_i32 = arith.constant 0 : i32
    %c0_i32_0 = arith.constant 0 : i32
    %c0_i32_1 = arith.constant 0 : i32
    return %c0_i32, %c0_i32_0 : i32, i32
  }
  func.func @transform_15(%arg0: i32) -> (i32, i32) {
    %c0_i32 = arith.constant 0 : i32
    %c0_i32_0 = arith.constant 0 : i32
    %c0_i32_1 = arith.constant 0 : i32
    return %c0_i32, %c0_i32_0 : i32, i32
  }
  func.func @transform_16(%arg0: i32) -> (i32, i32) {
    %c0_i32 = arith.constant 0 : i32
    %c0_i32_0 = arith.constant 0 : i32
    %c0_i32_1 = arith.constant 0 : i32
    return %c0_i32, %c0_i32_0 : i32, i32
  }
}

</mosaic_0001>

<llo_original>
// kernel: gpt_transformer_block.1
$region0: #{gpt_transformer_block.1}
  #allocation0 [shape = 'u32[]', space=smem, size = 0x4, offset = 0x4, fixed_abs, tag = 'smem constant byte address 0x4 - core index']
  #allocation1 [shape = 'u32[144,128]{1,0:T(1,128)}', space=vmem, size = 0x12000, scoped, tag = 'internal scratch']
  %s0 = inlined_call_operand.hbm [shape: f32[16,32], index: 0, kind: input, shape index: {}]
  %s1 = inlined_call_operand.vmem [shape: f32[1,32], index: 1, kind: input, shape index: {}]
  %s2 = inlined_call_operand.hbm [shape: f32[1,32], index: 2, kind: input, shape index: {}]
  %s3 = inlined_call_operand.vmem [shape: f32[32,96], index: 3, kind: input, shape index: {}]
  %s4 = inlined_call_operand.hbm [shape: f32[1,96], index: 4, kind: input, shape index: {}]
  %s5 = inlined_call_operand.vmem [shape: f32[32,32], index: 5, kind: input, shape index: {}]
  %s6 = inlined_call_operand.hbm [shape: f32[1,32], index: 6, kind: input, shape index: {}]
  %s7 = inlined_call_operand.hbm [shape: f32[1,32], index: 7, kind: input, shape index: {}]
  %s8 = inlined_call_operand.hbm [shape: f32[1,32], index: 8, kind: input, shape index: {}]
  %s9 = inlined_call_operand.vmem [shape: f32[32,64], index: 9, kind: input, shape index: {}]
  %s10 = inlined_call_operand.hbm [shape: f32[1,64], index: 10, kind: input, shape index: {}]
  %s11 = inlined_call_operand.vmem [shape: f32[64,32], index: 11, kind: input, shape index: {}]
  %s12 = inlined_call_operand.hbm [shape: f32[1,32], index: 12, kind: input, shape index: {}]
  %s13 = inlined_call_operand.vmem [shape: f32[64,32], index: 13, kind: input, shape index: {}]
  %s14 = inlined_call_operand.vmem [shape: f32[16,64], index: 14, kind: input, shape index: {}]
  %s15 = inlined_call_operand.vmem [shape: f32[64,64], index: 15, kind: input, shape index: {}]
  %s16 = inlined_call_operand.hbm [shape: f32[16,32], index: 16, kind: output, shape index: {}]
  %s17 = sld [smem:[#allocation0]]
  $region106: #{gpt_transformer_block.1} parent=0
    _
  %s19 = ssub.s32 1, %s17
  %s20 = scalar_select 0, %s19, %s17
  $region1: #{gpt_transformer_block.1} parent=0
    #allocation2 [shape = 'u8[8192]{0}', space=vmem, size = 0x2000, scoped, tag = 'input window, operand 0, single buffered']
    #allocation3 [shape = 's32[1]{0}', space=sflag, size = 0x4, scoped, tag = 'scoped memory for gpt_transformer_block.1']
    #allocation4 [shape = 's32[1]{0}', space=sflag, size = 0x4, scoped, tag = 'scoped memory for gpt_transformer_block.1']
    #allocation5 [shape = 'u8[512]{0}', space=vmem, size = 0x400, scoped, tag = 'input window, operand 2, single buffered']
    #allocation6 [shape = 's32[1]{0}', space=sflag, size = 0x4, scoped, tag = 'scoped memory for gpt_transformer_block.1']
    #allocation7 [shape = 'u8[512]{0}', space=vmem, size = 0x400, scoped, tag = 'input window, operand 4, single buffered']
    #allocation8 [shape = 'u8[512]{0}', space=vmem, size = 0x400, scoped, tag = 'input window, operand 6, single buffered']
    #allocation9 [shape = 's32[1]{0}', space=sflag, size = 0x4, scoped, tag = 'scoped memory for gpt_transformer_block.1']
    #allocation10 [shape = 'u8[512]{0}', space=vmem, size = 0x400, scoped, tag = 'input window, operand 7, single buffered']
    #allocation11 [shape = 'u8[512]{0}', space=vmem, size = 0x400, scoped, tag = 'input window, operand 8, single buffered']
    #allocation12 [shape = 's32[1]{0}', space=sflag, size = 0x4, scoped, tag = 'scoped memory for gpt_transformer_block.1']
    #allocation13 [shape = 'u8[512]{0}', space=vmem, size = 0x400, scoped, tag = 'input window, operand 10, single buffered']
    #allocation14 [shape = 'u8[512]{0}', space=vmem, size = 0x400, scoped, tag = 'input window, operand 12, single buffered']
    #allocation15 [shape = 's32[1]{0}', space=sflag, size = 0x4, scoped, tag = 'scoped memory for gpt_transformer_block.1']
    #allocation16 [shape = 'u8[8192]{0}', space=vmem, size = 0x2000, scoped, tag = 'output window, operand 0, single buffered']
    %21 = vsyncpa [#allocation3], 0
    %22 = vsyncpa [#allocation6], 0
    %23 = vsyncpa [#allocation9], 0
    %24 = vsyncpa [#allocation12], 0
    %25 = vsyncpa [#allocation15], 0
    %26 = vsyncpa [#allocation4], 0
    // Predicated region
    $region2: #{gpt_transformer_block.1} parent=1 // pred_check
      _
    $region3: #{gpt_transformer_block.1} parent=1 // pred_check_branch
      %28 = sbr.rel (0) target = $region5
    $region4: #{gpt_transformer_block.1} parent=1 // pred_region
      %s30 = ssub.s32 256, 256
      %31 = vsyncadd [#allocation3], %s30
      %s32 = sshll.u32 [#allocation2], 4
      %s33 = int_to_ptr.vmem [resolvable:$true] %s32
      %38 = dma.hbm_to_vmem [thread:$0]  %s0, 256, %s33, [#allocation3], 128, 128, 8
    $region5: #{gpt_transformer_block.1} parent=1 // pred_fallthru
      _
    // Predicated region
    $region6: #{gpt_transformer_block.1} parent=1 // pred_check
      _
    $region7: #{gpt_transformer_block.1} parent=1 // pred_check_branch
      %40 = sbr.rel (0) target = $region9
    $region8: #{gpt_transformer_block.1} parent=1 // pred_region
      _
    $region9: #{gpt_transformer_block.1} parent=1 // pred_fallthru
      _
    // Predicated region
    $region10: #{gpt_transformer_block.1} parent=1 // pred_check
      _
    $region11: #{gpt_transformer_block.1} parent=1 // pred_check_branch
      %42 = sbr.rel (0) target = $region13
    $region12: #{gpt_transformer_block.1} parent=1 // pred_region
      %s44 = ssub.s32 16, 16
      %45 = vsyncadd [#allocation6], %s44
      %s47 = sshll.u32 [#allocation5], 4
      %s48 = int_to_ptr.vmem [resolvable:$true] %s47
      %50 = dma.hbm_to_vmem [thread:$0]  %s2, 16, %s48, [#allocation6]
    $region13: #{gpt_transformer_block.1} parent=1 // pred_fallthru
      _
    // Predicated region
    $region14: #{gpt_transformer_block.1} parent=1 // pred_check
      _
    $region15: #{gpt_transformer_block.1} parent=1 // pred_check_branch
      %52 = sbr.rel (0) target = $region17
    $region16: #{gpt_transformer_block.1} parent=1 // pred_region
      _
    $region17: #{gpt_transformer_block.1} parent=1 // pred_fallthru
      _
    // Predicated region
    $region18: #{gpt_transformer_block.1} parent=1 // pred_check
      _
    $region19: #{gpt_transformer_block.1} parent=1 // pred_check_branch
      %54 = sbr.rel (0) target = $region21
    $region20: #{gpt_transformer_block.1} parent=1 // pred_region
      %s56 = ssub.s32 16, 16
      %57 = vsyncadd [#allocation6], %s56
      %s59 = sshll.u32 [#allocation7], 4
      %s60 = int_to_ptr.vmem [resolvable:$true] %s59
      %62 = dma.hbm_to_vmem [thread:$0]  %s4, 16, %s60, [#allocation6]
    $region21: #{gpt_transformer_block.1} parent=1 // pred_fallthru
      _
    // Predicated region
    $region22: #{gpt_transformer_block.1} parent=1 // pred_check
      _
    $region23: #{gpt_transformer_block.1} parent=1 // pred_check_branch
      %64 = sbr.rel (0) target = $region25
    $region24: #{gpt_transformer_block.1} parent=1 // pred_region
      _
    $region25: #{gpt_transformer_block.1} parent=1 // pred_fallthru
      _
    // Predicated region
    $region26: #{gpt_transformer_block.1} parent=1 // pred_check
      _
    $region27: #{gpt_transformer_block.1} parent=1 // pred_check_branch
      %66 = sbr.rel (0) target = $region29
    $region28: #{gpt_transformer_block.1} parent=1 // pred_region
      %s68 = ssub.s32 16, 16
      %69 = vsyncadd [#allocation9], %s68
      %s71 = sshll.u32 [#allocation8], 4
      %s72 = int_to_ptr.vmem [resolvable:$true] %s71
      %74 = dma.hbm_to_vmem [thread:$0]  %s6, 16, %s72, [#allocation9]
    $region29: #{gpt_transformer_block.1} parent=1 // pred_fallthru
      _
    // Predicated region
    $region30: #{gpt_transformer_block.1} parent=1 // pred_check
      _
    $region31: #{gpt_transformer_block.1} parent=1 // pred_check_branch
      %76 = sbr.rel (0) target = $region33
    $region32: #{gpt_transformer_block.1} parent=1 // pred_region
      %s78 = ssub.s32 16, 16
      %79 = vsyncadd [#allocation9], %s78
      %s81 = sshll.u32 [#allocation10], 4
      %s82 = int_to_ptr.vmem [resolvable:$true] %s81
      %84 = dma.hbm_to_vmem [thread:$0]  %s7, 16, %s82, [#allocation9]
    $region33: #{gpt_transformer_block.1} parent=1 // pred_fallthru
      _
    // Predicated region
    $region34: #{gpt_transformer_block.1} parent=1 // pred_check
      _
    $region35: #{gpt_transformer_block.1} parent=1 // pred_check_branch
      %86 = sbr.rel (0) target = $region37
    $region36: #{gpt_transformer_block.1} parent=1 // pred_region
      %s88 = ssub.s32 16, 16
      %89 = vsyncadd [#allocation12], %s88
      %s91 = sshll.u32 [#allocation11], 4
      %s92 = int_to_ptr.vmem [resolvable:$true] %s91
      %94 = dma.hbm_to_vmem [thread:$0]  %s8, 16, %s92, [#allocation12]
    $region37: #{gpt_transformer_block.1} parent=1 // pred_fallthru
      _
    // Predicated region
    $region38: #{gpt_transformer_block.1} parent=1 // pred_check
      _
    $region39: #{gpt_transformer_block.1} parent=1 // pred_check_branch
      %96 = sbr.rel (0) target = $region41
    $region40: #{gpt_transformer_block.1} parent=1 // pred_region
      _
    $region41: #{gpt_transformer_block.1} parent=1 // pred_fallthru
      _
    // Predicated region
    $region42: #{gpt_transformer_block.1} parent=1 // pred_check
      _
    $region43: #{gpt_transformer_block.1} parent=1 // pred_check_branch
      %98 = sbr.rel (0) target = $region45
    $region44: #{gpt_transformer_block.1} parent=1 // pred_region
      %s100 = ssub.s32 16, 16
      %101 = vsyncadd [#allocation12], %s100
      %s103 = sshll.u32 [#allocation13], 4
      %s104 = int_to_ptr.vmem [resolvable:$true] %s103
      %106 = dma.hbm_to_vmem [thread:$0]  %s10, 16, %s104, [#allocation12]
    $region45: #{gpt_transformer_block.1} parent=1 // pred_fallthru
      _
    // Predicated region
    $region46: #{gpt_transformer_block.1} parent=1 // pred_check
      _
    $region47: #{gpt_transformer_block.1} parent=1 // pred_check_branch
      %108 = sbr.rel (0) target = $region49
    $region48: #{gpt_transformer_block.1} parent=1 // pred_region
      _
    $region49: #{gpt_transformer_block.1} parent=1 // pred_fallthru
      _
    // Predicated region
    $region50: #{gpt_transformer_block.1} parent=1 // pred_check
      _
    $region51: #{gpt_transformer_block.1} parent=1 // pred_check_branch
      %110 = sbr.rel (0) target = $region53
    $region52: #{gpt_transformer_block.1} parent=1 // pred_region
      %s112 = ssub.s32 16, 16
      %113 = vsyncadd [#allocation15], %s112
      %s115 = sshll.u32 [#allocation14], 4
      %s116 = int_to_ptr.vmem [resolvable:$true] %s115
      %118 = dma.hbm_to_vmem [thread:$0]  %s12, 16, %s116, [#allocation15]
    $region53: #{gpt_transformer_block.1} parent=1 // pred_fallthru
      _
    // Predicated region
    $region54: #{gpt_transformer_block.1} parent=1 // pred_check
      _
    $region55: #{gpt_transformer_block.1} parent=1 // pred_check_branch
      %120 = sbr.rel (0) target = $region57
    $region56: #{gpt_transformer_block.1} parent=1 // pred_region
      _
    $region57: #{gpt_transformer_block.1} parent=1 // pred_fallthru
      _
    // Predicated region
    $region58: #{gpt_transformer_block.1} parent=1 // pred_check
      _
    $region59: #{gpt_transformer_block.1} parent=1 // pred_check_branch
      %122 = sbr.rel (0) target = $region61
    $region60: #{gpt_transformer_block.1} parent=1 // pred_region
      _
    $region61: #{gpt_transformer_block.1} parent=1 // pred_fallthru
      _
    // Predicated region
    $region62: #{gpt_transformer_block.1} parent=1 // pred_check
      _
    $region63: #{gpt_transformer_block.1} parent=1 // pred_check_branch
      %124 = sbr.rel (0) target = $region65
    $region64: #{gpt_transformer_block.1} parent=1 // pred_region
      _
    $region65: #{gpt_transformer_block.1} parent=1 // pred_fallthru
      _
    // Predicated region
    $region66: #{gpt_transformer_block.1} parent=1 // pred_check
      _
    $region67: #{gpt_transformer_block.1} parent=1 // pred_check_branch
      %126 = sbr.rel (0) target = $region69
    $region68: #{gpt_transformer_block.1} parent=1 // pred_region
      %127 = dma.done [#allocation3], 256
    $region69: #{gpt_transformer_block.1} parent=1 // pred_fallthru
      _
    // Predicated region
    $region70: #{gpt_transformer_block.1} parent=1 // pred_check
      _
    $region71: #{gpt_transformer_block.1} parent=1 // pred_check_branch
      %129 = sbr.rel (0) target = $region73
    $region72: #{gpt_transformer_block.1} parent=1 // pred_region
      %130 = dma.done [#allocation6], 16
    $region73: #{gpt_transformer_block.1} parent=1 // pred_fallthru
      _
    // Predicated region
    $region74: #{gpt_transformer_block.1} parent=1 // pred_check
      _
    $region75: #{gpt_transformer_block.1} parent=1 // pred_check_branch
      %132 = sbr.rel (0) target = $region77
    $region76: #{gpt_transformer_block.1} parent=1 // pred_region
      %133 = dma.done [#allocation6], 16
    $region77: #{gpt_transformer_block.1} parent=1 // pred_fallthru
      _
    // Predicated region
    $region78: #{gpt_transformer_block.1} parent=1 // pred_check
      _
    $region79: #{gpt_transformer_block.1} parent=1 // pred_check_branch
      %135 = sbr.rel (0) target = $region81
    $region80: #{gpt_transformer_block.1} parent=1 // pred_region
      %136 = dma.done [#allocation9], 16
    $region81: #{gpt_transformer_block.1} parent=1 // pred_fallthru
      _
    // Predicated region
    $region82: #{gpt_transformer_block.1} parent=1 // pred_check
      _
    $region83: #{gpt_transformer_block.1} parent=1 // pred_check_branch
      %138 = sbr.rel (0) target = $region85
    $region84: #{gpt_transformer_block.1} parent=1 // pred_region
      %139 = dma.done [#allocation9], 16
    $region85: #{gpt_transformer_block.1} parent=1 // pred_fallthru
      _
    // Predicated region
    $region86: #{gpt_transformer_block.1} parent=1 // pred_check
      _
    $region87: #{gpt_transformer_block.1} parent=1 // pred_check_branch
      %141 = sbr.rel (0) target = $region89
    $region88: #{gpt_transformer_block.1} parent=1 // pred_region
      %142 = dma.done [#allocation12], 16
    $region89: #{gpt_transformer_block.1} parent=1 // pred_fallthru
      _
    // Predicated region
    $region90: #{gpt_transformer_block.1} parent=1 // pred_check
      _
    $region91: #{gpt_transformer_block.1} parent=1 // pred_check_branch
      %144 = sbr.rel (0) target = $region93
    $region92: #{gpt_transformer_block.1} parent=1 // pred_region
      %145 = dma.done [#allocation12], 16
    $region93: #{gpt_transformer_block.1} parent=1 // pred_fallthru
      _
    // Predicated region
    $region94: #{gpt_transformer_block.1} parent=1 // pred_check
      _
    $region95: #{gpt_transformer_block.1} parent=1 // pred_check_branch
      %147 = sbr.rel (0) target = $region97
    $region96: #{gpt_transformer_block.1} parent=1 // pred_region
      %148 = dma.done [#allocation15], 16
    $region97: #{gpt_transformer_block.1} parent=1 // pred_fallthru
      _
    %v149 = vld [vmem:[#allocation2] sm:$0xff]
    %v150 = vld [vmem:[#allocation2 + $0x8] sm:$0xff]
    %v151 = vld [vmem:[%s1] sm:$0x1]
    %v152 = vld [vmem:[#allocation5] sm:$0x1]
    %vm153 = vcmask 261120
    %v154 = vsel %vm153, %v149, 0.0
    %155 = vadd.xlane.f32.xlu0 %v154
    %v156 = vpop.xlane.xlu0 %155
    %v157 = vsel %vm153, %v150, 0.0
    %158 = vadd.xlane.f32.xlu0 %v157
    %v159 = vpop.xlane.xlu0 %158
    %v160 = vrcp.pop 32.0
    %v161 = vmul.f32 %v156, %v160
    %v162 = vmul.f32 %v159, %v160
    %v163 = vsub.f32 %v149, %v161
    %v164 = vsub.f32 %v150, %v162
    %v165 = vmul.f32 %v163, %v163
    %v166 = vmul.f32 %v164, %v164
    %v167 = vsel %vm153, %v165, 0.0
    %168 = vadd.xlane.f32.xlu0 %v167
    %v169 = vpop.xlane.xlu0 %168
    %v170 = vsel %vm153, %v166, 0.0
    %171 = vadd.xlane.f32.xlu0 %v170
    %v172 = vpop.xlane.xlu0 %171
    %v173 = vmul.f32 %v169, %v160
    %v174 = vmul.f32 %v172, %v160
    %v175 = vadd.f32 %v173, 1e-05
    %v176 = vadd.f32 %v174, 1e-05
    %v177 = vrsqrt.pop %v175
    %v178 = vrsqrt.pop %v176
    %v179 = vmul.f32 %v163, %v177
    %v180 = vmul.f32 %v164, %v178
    %v182 = vlaneseq
    %v183 = vshrl.u32 %v182, 7
    %v184 = vsub.s32 0, %v183
    %v185 = vrot.slane %v151, %v184
    %v187 = vmul.f32 %v179, %v185
    %v188 = vmul.f32 %v180, %v185
    %v190 = vlaneseq
    %v191 = vshrl.u32 %v190, 7
    %v192 = vsub.s32 0, %v191
    %v193 = vrot.slane %v152, %v192
    %v195 = vadd.f32 %v187, %v193
    %v196 = vadd.f32 %v188, %v193
    %v197 = vld [vmem:[%s3] sm:$0xff]
    %v198 = vld [vmem:[%s3 + $0x8] sm:$0xff]
    %v199 = vld [vmem:[%s3 + $0x10] sm:$0xff]
    %v200 = vld [vmem:[%s3 + $0x18] sm:$0xff]
    %v201 = vld [vmem:[#allocation7] sm:$0x1]
    %v203 = vlaneseq
    %v204 = vshrl.u32 %v203, 7
    %v205 = vsub.s32 0, %v204
    %v206 = vrot.slane %v201, %v205
    %v209 = vsel %vm153, %v195, 0
    %v212 = vsel %vm153, %v196, 0
    %214 = vmatprep.subr.mxu0 0.0
    %215 = vmatpush1.msra.mxu0 %v197
    %216 = vmatprep.subr.mxu0 0.0
    %217 = vmatpush1.msra.mxu0 %v198
    %218 = vmatprep.subr.mxu0 0.0
    %219 = vmatpush1.msra.mxu0 %v199
    %220 = vmatprep.subr.mxu0 0.0
    %221 = vmatpush1.msra.mxu0 %v200
    %222 = vmatprep.subr.mxu0 0.0
    %223 = vmatpush1.msra.mxu0 0.0
    %224 = vmatprep.subr.mxu0 0.0
    %225 = vmatpush1.msra.mxu0 0.0
    %226 = vmatprep.subr.mxu0 0.0
    %227 = vmatpush1.msra.mxu0 0.0
    %228 = vmatprep.subr.mxu0 0.0
    %229 = vmatpush1.msra.mxu0 0.0
    %230 = vmatprep.subr.mxu0 0.0
    %231 = vmatpush1.msra.mxu0 0.0
    %232 = vmatprep.subr.mxu0 0.0
    %233 = vmatpush1.msra.mxu0 0.0
    %234 = vmatprep.subr.mxu0 0.0
    %235 = vmatpush1.msra.mxu0 0.0
    %236 = vmatprep.subr.mxu0 0.0
    %237 = vmatpush1.msra.mxu0 0.0
    %238 = vmatprep.subr.mxu0 0.0
    %239 = vmatpush1.msra.mxu0 0.0
    %240 = vmatprep.subr.mxu0 0.0
    %241 = vmatpush1.msra.mxu0 0.0
    %242 = vmatprep.subr.mxu0 0.0
    %243 = vmatpush1.msra.mxu0 0.0
    %244 = vmatprep.subr.mxu0 0.0
    %245 = vmatpush1.msra.mxu0 0.0
    %246 = vmatprep.subr.mxu0 0.0
    %247 = vmatpush1.msra.mxu0 0.0
    %248 = vmatprep.subr.mxu0 0.0
    %249 = vmatpush1.msra.mxu0 0.0
    %250 = vmatprep.subr.mxu0 0.0
    %251 = vmatpush1.msra.mxu0 0.0
    %252 = vmatprep.subr.mxu0 0.0
    %253 = vmatpush1.msra.mxu0 0.0
    %254 = vmatprep.subr.mxu0 0.0
    %255 = vmatpush1.msra.mxu0 0.0
    %256 = vmatprep.subr.mxu0 0.0
    %257 = vmatpush1.msra.mxu0 0.0
    %258 = vmatprep.subr.mxu0 0.0
    %259 = vmatpush1.msra.mxu0 0.0
    %260 = vmatprep.subr.mxu0 0.0
    %261 = vmatpush1.msra.mxu0 0.0
    %262 = vmatprep.subr.mxu0 0.0
    %263 = vmatpush1.msra.mxu0 0.0
    %264 = vmatprep.subr.mxu0 0.0
    %265 = vmatpush1.msra.mxu0 0.0
    %266 = vmatprep.subr.mxu0 0.0
    %267 = vmatpush1.msra.mxu0 0.0
    %268 = vmatprep.subr.mxu0 0.0
    %269 = vmatpush1.msra.mxu0 0.0
    %270 = vmatprep.subr.mxu0 0.0
    %271 = vmatpush1.msra.mxu0 0.0
    %272 = vmatprep.subr.mxu0 0.0
    %273 = vmatpush1.msra.mxu0 0.0
    %274 = vmatprep.subr.mxu0 0.0
    %275 = vmatpush1.msra.mxu0 0.0
    %276 = vmatprep.subr.mxu0 0.0
    %277 = vmatpush1.msra.mxu0 0.0
    %278 = vmatprep.mubr.f32.mxu0 0.0
    %279 = vmatmul.mubr.f32.gmra.mrb[0].mxu0 %v209
    %v280 = vpop.f32.mrb[0].mxu0
    %v281 = vadd.f32 %v206, %v280
    %v282 = vpop.f32.mrb[0].mxu0
    %283 = vmatprep.mubr.f32.mxu0 0.0
    %284 = vmatmul.mubr.f32.gmra.mrb[0].mxu0 %v212
    %v285 = vpop.f32.mrb[0].mxu0
    %v286 = vadd.f32 %v206, %v285
    %v287 = vpop.f32.mrb[0].mxu0
    %288 = vdwg.mxu0
    %v289 = vld [vmem:[%s13] sm:$0xff]
    %v290 = vld [vmem:[%s13 + $0x8] sm:$0xff]
    %v291 = vld [vmem:[%s13 + $0x10] sm:$0xff]
    %v292 = vld [vmem:[%s13 + $0x18] sm:$0xff]
    %v293 = vld [vmem:[%s13 + $0x20] sm:$0xff]
    %v294 = vld [vmem:[%s13 + $0x28] sm:$0xff]
    %v295 = vld [vmem:[%s13 + $0x30] sm:$0xff]
    %v296 = vld [vmem:[%s13 + $0x38] sm:$0xff]
    %305 = vrot.lane.b32.xlu0 %v289, 32
    %v306 = vpop.permute.xlu0 %305
    %307 = vrot.lane.b32.xlu0 %v290, 32
    %v308 = vpop.permute.xlu0 %307
    %309 = vrot.lane.b32.xlu0 %v291, 32
    %v310 = vpop.permute.xlu0 %309
    %311 = vrot.lane.b32.xlu0 %v292, 32
    %v312 = vpop.permute.xlu0 %311
    %313 = vrot.lane.b32.xlu0 %v293, 32
    %v314 = vpop.permute.xlu0 %313
    %315 = vrot.lane.b32.xlu0 %v294, 32
    %v316 = vpop.permute.xlu0 %315
    %317 = vrot.lane.b32.xlu0 %v295, 32
    %v318 = vpop.permute.xlu0 %317
    %319 = vrot.lane.b32.xlu0 %v296, 32
    %v320 = vpop.permute.xlu0 %319
    %v329 = vmul.f32 %v281, %v306
    %v330 = vmul.f32 %v286, %v308
    %v331 = vmul.f32 %v281, %v310
    %v332 = vmul.f32 %v286, %v312
    %v333 = vmul.f32 %v281, %v314
    %v334 = vmul.f32 %v286, %v316
    %v335 = vmul.f32 %v281, %v318
    %v336 = vmul.f32 %v286, %v320
    %337 = vrot.lane.b32.xlu0 %v289, 64
    %v338 = vpop.permute.xlu0 %337
    %339 = vrot.lane.b32.xlu0 %v290, 64
    %v340 = vpop.permute.xlu0 %339
    %341 = vrot.lane.b32.xlu0 %v291, 64
    %v342 = vpop.permute.xlu0 %341
    %343 = vrot.lane.b32.xlu0 %v292, 64
    %v344 = vpop.permute.xlu0 %343
    %345 = vrot.lane.b32.xlu0 %v293, 64
    %v346 = vpop.permute.xlu0 %345
    %347 = vrot.lane.b32.xlu0 %v294, 64
    %v348 = vpop.permute.xlu0 %347
    %349 = vrot.lane.b32.xlu0 %v295, 64
    %v350 = vpop.permute.xlu0 %349
    %351 = vrot.lane.b32.xlu0 %v296, 64
    %v352 = vpop.permute.xlu0 %351
    %v361 = vmul.f32 %v281, %v338
    %v362 = vmul.f32 %v286, %v340
    %v363 = vmul.f32 %v281, %v342
    %v364 = vmul.f32 %v286, %v344
    %v365 = vmul.f32 %v281, %v346
    %v366 = vmul.f32 %v286, %v348
    %v367 = vmul.f32 %v281, %v350
    %v368 = vmul.f32 %v286, %v352
    %v369 = vld [vmem:[%s14] sm:$0xff]
    %v370 = vld [vmem:[%s14 + $0x8] sm:$0xff]
    %379 = vrot.lane.b32.xlu0 %v329, 96
    %v380 = vpop.permute.xlu0 %379
    %381 = vrot.lane.b32.xlu0 %v330, 96
    %v382 = vpop.permute.xlu0 %381
    %383 = vrot.lane.b32.xlu0 %v331, 96
    %v384 = vpop.permute.xlu0 %383
    %385 = vrot.lane.b32.xlu0 %v332, 96
    %v386 = vpop.permute.xlu0 %385
    %387 = vrot.lane.b32.xlu0 %v333, 96
    %v388 = vpop.permute.xlu0 %387
    %389 = vrot.lane.b32.xlu0 %v334, 96
    %v390 = vpop.permute.xlu0 %389
    %391 = vrot.lane.b32.xlu0 %v335, 96
    %v392 = vpop.permute.xlu0 %391
    %393 = vrot.lane.b32.xlu0 %v336, 96
    %v394 = vpop.permute.xlu0 %393
    %v396 = vsel %vm153, %v281, 0
    %v399 = vsel %vm153, %v286, 0
    %v401 = vsel %vm153, %v380, 0
    %v403 = vsel %vm153, %v382, 0
    %v405 = vsel %vm153, %v384, 0
    %v407 = vsel %vm153, %v386, 0
    %v409 = vsel %vm153, %v388, 0
    %v411 = vsel %vm153, %v390, 0
    %v413 = vsel %vm153, %v392, 0
    %v415 = vsel %vm153, %v394, 0
    %417 = vmatprep.subr.mxu0 0.0
    %418 = vmatpush1.xpose.msra.mxu0 %v401
    %419 = vmatprep.subr.mxu0 0.0
    %420 = vmatpush1.xpose.msra.mxu0 %v403
    %421 = vmatprep.subr.mxu0 0.0
    %422 = vmatpush1.xpose.msra.mxu0 %v405
    %423 = vmatprep.subr.mxu0 0.0
    %424 = vmatpush1.xpose.msra.mxu0 %v407
    %425 = vmatprep.subr.mxu0 0.0
    %426 = vmatpush1.xpose.msra.mxu0 %v409
    %427 = vmatprep.subr.mxu0 0.0
    %428 = vmatpush1.xpose.msra.mxu0 %v411
    %429 = vmatprep.subr.mxu0 0.0
    %430 = vmatpush1.xpose.msra.mxu0 %v413
    %431 = vmatprep.subr.mxu0 0.0
    %432 = vmatpush1.xpose.msra.mxu0 %v415
    %433 = vmatprep.subr.mxu0 0.0
    %434 = vmatpush1.xpose.msra.mxu0 0.0
    %435 = vmatprep.subr.mxu0 0.0
    %436 = vmatpush1.xpose.msra.mxu0 0.0
    %437 = vmatprep.subr.mxu0 0.0
    %438 = vmatpush1.xpose.msra.mxu0 0.0
    %439 = vmatprep.subr.mxu0 0.0
    %440 = vmatpush1.xpose.msra.mxu0 0.0
    %441 = vmatprep.subr.mxu0 0.0
    %442 = vmatpush1.xpose.msra.mxu0 0.0
    %443 = vmatprep.subr.mxu0 0.0
    %444 = vmatpush1.xpose.msra.mxu0 0.0
    %445 = vmatprep.subr.mxu0 0.0
    %446 = vmatpush1.xpose.msra.mxu0 0.0
    %447 = vmatprep.subr.mxu0 0.0
    %448 = vmatpush1.xpose.msra.mxu0 0.0
    %449 = vmatprep.subr.mxu0 0.0
    %450 = vmatpush1.xpose.msra.mxu0 0.0
    %451 = vmatprep.subr.mxu0 0.0
    %452 = vmatpush1.xpose.msra.mxu0 0.0
    %453 = vmatprep.subr.mxu0 0.0
    %454 = vmatpush1.xpose.msra.mxu0 0.0
    %455 = vmatprep.subr.mxu0 0.0
    %456 = vmatpush1.xpose.msra.mxu0 0.0
    %457 = vmatprep.subr.mxu0 0.0
    %458 = vmatpush1.xpose.msra.mxu0 0.0
    %459 = vmatprep.subr.mxu0 0.0
    %460 = vmatpush1.xpose.msra.mxu0 0.0
    %461 = vmatprep.subr.mxu0 0.0
    %462 = vmatpush1.xpose.msra.mxu0 0.0
    %463 = vmatprep.subr.mxu0 0.0
    %464 = vmatpush1.xpose.msra.mxu0 0.0
    %465 = vmatprep.subr.mxu0 0.0
    %466 = vmatpush1.xpose.msra.mxu0 0.0
    %467 = vmatprep.subr.mxu0 0.0
    %468 = vmatpush1.xpose.msra.mxu0 0.0
    %469 = vmatprep.subr.mxu0 0.0
    %470 = vmatpush1.xpose.msra.mxu0 0.0
    %471 = vmatprep.subr.mxu0 0.0
    %472 = vmatpush1.xpose.msra.mxu0 0.0
    %473 = vmatprep.subr.mxu0 0.0
    %474 = vmatpush1.xpose.msra.mxu0 0.0
    %475 = vmatprep.subr.mxu0 0.0
    %476 = vmatpush1.xpose.msra.mxu0 0.0
    %477 = vmatprep.subr.mxu0 0.0
    %478 = vmatpush1.xpose.msra.mxu0 0.0
    %479 = vmatprep.subr.mxu0 0.0
    %480 = vmatpush1.xpose.msra.mxu0 0.0
    %481 = vmatprep.mubr.f32.mxu0 0.0
    %482 = vmatmul.mubr.f32.gmra.mrb[0].mxu0 %v396
    %v483 = vpop.f32.mrb[0].mxu0
    %v484 = vadd.f32 %v369, %v483
    %v485 = vpop.f32.mrb[0].mxu0
    %486 = vmatprep.mubr.f32.mxu0 0.0
    %487 = vmatmul.mubr.f32.gmra.mrb[0].mxu0 %v399
    %v488 = vpop.f32.mrb[0].mxu0
    %v489 = vadd.f32 %v370, %v488
    %v490 = vpop.f32.mrb[0].mxu0
    %491 = vdwg.mxu0
    %vm492 = vcmask 523264
    %v493 = vsel %vm492, %v484, -inf
    %494 = vmax.xlane.f32.xlu0 %v493
    %v495 = vpop.xlane.xlu0 %494
    %v496 = vsel %vm492, %v489, -inf
    %497 = vmax.xlane.f32.xlu0 %v496
    %v498 = vpop.xlane.xlu0 %497
    %v499 = vsub.f32 %v484, %v495
    %v500 = vsub.f32 %v489, %v498
    %v501 = vmul.f32 %v499, 1.442695
    %v502 = vpow.pop %v501
    %v503 = vmul.f32 %v500, 1.442695
    %v504 = vpow.pop %v503
    %v505 = vld [vmem:[%s15] sm:$0xff]
    %v506 = vld [vmem:[%s15 + $0x8] sm:$0xff]
    %v507 = vld [vmem:[%s15 + $0x10] sm:$0xff]
    %v508 = vld [vmem:[%s15 + $0x18] sm:$0xff]
    %v509 = vld [vmem:[%s15 + $0x20] sm:$0xff]
    %v510 = vld [vmem:[%s15 + $0x28] sm:$0xff]
    %v511 = vld [vmem:[%s15 + $0x30] sm:$0xff]
    %v512 = vld [vmem:[%s15 + $0x38] sm:$0xff]
    %v514 = vsel %vm492, %v502, 0
    %v517 = vsel %vm492, %v504, 0
    %519 = vmatprep.subr.mxu0 0.0
    %520 = vmatpush1.msra.mxu0 %v505
    %521 = vmatprep.subr.mxu0 0.0
    %522 = vmatpush1.msra.mxu0 %v506
    %523 = vmatprep.subr.mxu0 0.0
    %524 = vmatpush1.msra.mxu0 %v507
    %525 = vmatprep.subr.mxu0 0.0
    %526 = vmatpush1.msra.mxu0 %v508
    %527 = vmatprep.subr.mxu0 0.0
    %528 = vmatpush1.msra.mxu0 %v509
    %529 = vmatprep.subr.mxu0 0.0
    %530 = vmatpush1.msra.mxu0 %v510
    %531 = vmatprep.subr.mxu0 0.0
    %532 = vmatpush1.msra.mxu0 %v511
    %533 = vmatprep.subr.mxu0 0.0
    %534 = vmatpush1.msra.mxu0 %v512
    %535 = vmatprep.subr.mxu0 0.0
    %536 = vmatpush1.msra.mxu0 0.0
    %537 = vmatprep.subr.mxu0 0.0
    %538 = vmatpush1.msra.mxu0 0.0
    %539 = vmatprep.subr.mxu0 0.0
    %540 = vmatpush1.msra.mxu0 0.0
    %541 = vmatprep.subr.mxu0 0.0
    %542 = vmatpush1.msra.mxu0 0.0
    %543 = vmatprep.subr.mxu0 0.0
    %544 = vmatpush1.msra.mxu0 0.0
    %545 = vmatprep.subr.mxu0 0.0
    %546 = vmatpush1.msra.mxu0 0.0
    %547 = vmatprep.subr.mxu0 0.0
    %548 = vmatpush1.msra.mxu0 0.0
    %549 = vmatprep.subr.mxu0 0.0
    %550 = vmatpush1.msra.mxu0 0.0
    %551 = vmatprep.subr.mxu0 0.0
    %552 = vmatpush1.msra.mxu0 0.0
    %553 = vmatprep.subr.mxu0 0.0
    %554 = vmatpush1.msra.mxu0 0.0
    %555 = vmatprep.subr.mxu0 0.0
    %556 = vmatpush1.msra.mxu0 0.0
    %557 = vmatprep.subr.mxu0 0.0
    %558 = vmatpush1.msra.mxu0 0.0
    %559 = vmatprep.subr.mxu0 0.0
    %560 = vmatpush1.msra.mxu0 0.0
    %561 = vmatprep.subr.mxu0 0.0
    %562 = vmatpush1.msra.mxu0 0.0
    %563 = vmatprep.subr.mxu0 0.0
    %564 = vmatpush1.msra.mxu0 0.0
    %565 = vmatprep.subr.mxu0 0.0
    %566 = vmatpush1.msra.mxu0 0.0
    %567 = vmatprep.subr.mxu0 0.0
    %568 = vmatpush1.msra.mxu0 0.0
    %569 = vmatprep.subr.mxu0 0.0
    %570 = vmatpush1.msra.mxu0 0.0
    %571 = vmatprep.subr.mxu0 0.0
    %572 = vmatpush1.msra.mxu0 0.0
    %573 = vmatprep.subr.mxu0 0.0
    %574 = vmatpush1.msra.mxu0 0.0
    %575 = vmatprep.subr.mxu0 0.0
    %576 = vmatpush1.msra.mxu0 0.0
    %577 = vmatprep.subr.mxu0 0.0
    %578 = vmatpush1.msra.mxu0 0.0
    %579 = vmatprep.subr.mxu0 0.0
    %580 = vmatpush1.msra.mxu0 0.0
    %581 = vmatprep.subr.mxu0 0.0
    %582 = vmatpush1.msra.mxu0 0.0
    %583 = vmatprep.mubr.f32.mxu0 0.0
    %584 = vmatmul.mubr.f32.gmra.mrb[0].mxu0 %v514
    %v585 = vpop.f32.mrb[0].mxu0
    %v586 = vadd.f32 0.0, %v585
    %v587 = vpop.f32.mrb[0].mxu0
    %588 = vmatprep.mubr.f32.mxu0 0.0
    %589 = vmatmul.mubr.f32.gmra.mrb[0].mxu0 %v517
    %v590 = vpop.f32.mrb[0].mxu0
    %v591 = vadd.f32 0.0, %v590
    %v592 = vpop.f32.mrb[0].mxu0
    %593 = vdwg.mxu0
    %v594 = vrcp.pop %v586
    %v595 = vrcp.pop %v591
    %v596 = vmul.f32 %v502, %v594
    %v597 = vmul.f32 %v504, %v595
    %606 = vrot.lane.b32.xlu0 %v361, 64
    %v607 = vpop.permute.xlu0 %606
    %608 = vrot.lane.b32.xlu0 %v362, 64
    %v609 = vpop.permute.xlu0 %608
    %610 = vrot.lane.b32.xlu0 %v363, 64
    %v611 = vpop.permute.xlu0 %610
    %612 = vrot.lane.b32.xlu0 %v364, 64
    %v613 = vpop.permute.xlu0 %612
    %614 = vrot.lane.b32.xlu0 %v365, 64
    %v615 = vpop.permute.xlu0 %614
    %616 = vrot.lane.b32.xlu0 %v366, 64
    %v617 = vpop.permute.xlu0 %616
    %618 = vrot.lane.b32.xlu0 %v367, 64
    %v619 = vpop.permute.xlu0 %618
    %620 = vrot.lane.b32.xlu0 %v368, 64
    %v621 = vpop.permute.xlu0 %620
    %v631 = vsel %vm492, %v596, 0
    %v634 = vsel %vm492, %v597, 0
    %636 = vmatprep.subr.mxu0 0.0
    %637 = vmatpush1.msra.mxu0 %v607
    %638 = vmatprep.subr.mxu0 0.0
    %639 = vmatpush1.msra.mxu0 %v609
    %640 = vmatprep.subr.mxu0 0.0
    %641 = vmatpush1.msra.mxu0 %v611
    %642 = vmatprep.subr.mxu0 0.0
    %643 = vmatpush1.msra.mxu0 %v613
    %644 = vmatprep.subr.mxu0 0.0
    %645 = vmatpush1.msra.mxu0 %v615
    %646 = vmatprep.subr.mxu0 0.0
    %647 = vmatpush1.msra.mxu0 %v617
    %648 = vmatprep.subr.mxu0 0.0
    %649 = vmatpush1.msra.mxu0 %v619
    %650 = vmatprep.subr.mxu0 0.0
    %651 = vmatpush1.msra.mxu0 %v621
    %652 = vmatprep.subr.mxu0 0.0
    %653 = vmatpush1.msra.mxu0 0.0
    %654 = vmatprep.subr.mxu0 0.0
    %655 = vmatpush1.msra.mxu0 0.0
    %656 = vmatprep.subr.mxu0 0.0
    %657 = vmatpush1.msra.mxu0 0.0
    %658 = vmatprep.subr.mxu0 0.0
    %659 = vmatpush1.msra.mxu0 0.0
    %660 = vmatprep.subr.mxu0 0.0
    %661 = vmatpush1.msra.mxu0 0.0
    %662 = vmatprep.subr.mxu0 0.0
    %663 = vmatpush1.msra.mxu0 0.0
    %664 = vmatprep.subr.mxu0 0.0
    %665 = vmatpush1.msra.mxu0 0.0
    %666 = vmatprep.subr.mxu0 0.0
    %667 = vmatpush1.msra.mxu0 0.0
    %668 = vmatprep.subr.mxu0 0.0
    %669 = vmatpush1.msra.mxu0 0.0
    %670 = vmatprep.subr.mxu0 0.0
    %671 = vmatpush1.msra.mxu0 0.0
    %672 = vmatprep.subr.mxu0 0.0
    %673 = vmatpush1.msra.mxu0 0.0
    %674 = vmatprep.subr.mxu0 0.0
    %675 = vmatpush1.msra.mxu0 0.0
    %676 = vmatprep.subr.mxu0 0.0
    %677 = vmatpush1.msra.mxu0 0.0
    %678 = vmatprep.subr.mxu0 0.0
    %679 = vmatpush1.msra.mxu0 0.0
    %680 = vmatprep.subr.mxu0 0.0
    %681 = vmatpush1.msra.mxu0 0.0
    %682 = vmatprep.subr.mxu0 0.0
    %683 = vmatpush1.msra.mxu0 0.0
    %684 = vmatprep.subr.mxu0 0.0
    %685 = vmatpush1.msra.mxu0 0.0
    %686 = vmatprep.subr.mxu0 0.0
    %687 = vmatpush1.msra.mxu0 0.0
    %688 = vmatprep.subr.mxu0 0.0
    %689 = vmatpush1.msra.mxu0 0.0
    %690 = vmatprep.subr.mxu0 0.0
    %691 = vmatpush1.msra.mxu0 0.0
    %692 = vmatprep.subr.mxu0 0.0
    %693 = vmatpush1.msra.mxu0 0.0
    %694 = vmatprep.subr.mxu0 0.0
    %695 = vmatpush1.msra.mxu0 0.0
    %696 = vmatprep.subr.mxu0 0.0
    %697 = vmatpush1.msra.mxu0 0.0
    %698 = vmatprep.subr.mxu0 0.0
    %699 = vmatpush1.msra.mxu0 0.0
    %700 = vmatprep.mubr.f32.mxu0 0.0
    %701 = vmatmul.mubr.f32.gmra.mrb[0].mxu0 %v631
    %v702 = vpop.f32.mrb[0].mxu0
    %v703 = vadd.f32 0.0, %v702
    %v704 = vpop.f32.mrb[0].mxu0
    %705 = vmatprep.mubr.f32.mxu0 0.0
    %706 = vmatmul.mubr.f32.gmra.mrb[0].mxu0 %v634
    %v707 = vpop.f32.mrb[0].mxu0
    %v708 = vadd.f32 0.0, %v707
    %v709 = vpop.f32.mrb[0].mxu0
    %710 = vdwg.mxu0
    %v711 = vld [vmem:[%s5] sm:$0xff]
    %v712 = vld [vmem:[%s5 + $0x8] sm:$0xff]
    %v713 = vld [vmem:[%s5 + $0x10] sm:$0xff]
    %v714 = vld [vmem:[%s5 + $0x18] sm:$0xff]
    %v715 = vld [vmem:[#allocation8] sm:$0x1]
    %v717 = vlaneseq
    %v718 = vshrl.u32 %v717, 7
    %v719 = vsub.s32 0, %v718
    %v720 = vrot.slane %v715, %v719
    %v723 = vsel %vm153, %v703, 0
    %v726 = vsel %vm153, %v708, 0
    %728 = vmatprep.subr.mxu0 0.0
    %729 = vmatpush1.msra.mxu0 %v711
    %730 = vmatprep.subr.mxu0 0.0
    %731 = vmatpush1.msra.mxu0 %v712
    %732 = vmatprep.subr.mxu0 0.0
    %733 = vmatpush1.msra.mxu0 %v713
    %734 = vmatprep.subr.mxu0 0.0
    %735 = vmatpush1.msra.mxu0 %v714
    %736 = vmatprep.subr.mxu0 0.0
    %737 = vmatpush1.msra.mxu0 0.0
    %738 = vmatprep.subr.mxu0 0.0
    %739 = vmatpush1.msra.mxu0 0.0
    %740 = vmatprep.subr.mxu0 0.0
    %741 = vmatpush1.msra.mxu0 0.0
    %742 = vmatprep.subr.mxu0 0.0
    %743 = vmatpush1.msra.mxu0 0.0
    %744 = vmatprep.subr.mxu0 0.0
    %745 = vmatpush1.msra.mxu0 0.0
    %746 = vmatprep.subr.mxu0 0.0
    %747 = vmatpush1.msra.mxu0 0.0
    %748 = vmatprep.subr.mxu0 0.0
    %749 = vmatpush1.msra.mxu0 0.0
    %750 = vmatprep.subr.mxu0 0.0
    %751 = vmatpush1.msra.mxu0 0.0
    %752 = vmatprep.subr.mxu0 0.0
    %753 = vmatpush1.msra.mxu0 0.0
    %754 = vmatprep.subr.mxu0 0.0
    %755 = vmatpush1.msra.mxu0 0.0
    %756 = vmatprep.subr.mxu0 0.0
    %757 = vmatpush1.msra.mxu0 0.0
    %758 = vmatprep.subr.mxu0 0.0
    %759 = vmatpush1.msra.mxu0 0.0
    %760 = vmatprep.subr.mxu0 0.0
    %761 = vmatpush1.msra.mxu0 0.0
    %762 = vmatprep.subr.mxu0 0.0
    %763 = vmatpush1.msra.mxu0 0.0
    %764 = vmatprep.subr.mxu0 0.0
    %765 = vmatpush1.msra.mxu0 0.0
    %766 = vmatprep.subr.mxu0 0.0
    %767 = vmatpush1.msra.mxu0 0.0
    %768 = vmatprep.subr.mxu0 0.0
    %769 = vmatpush1.msra.mxu0 0.0
    %770 = vmatprep.subr.mxu0 0.0
    %771 = vmatpush1.msra.mxu0 0.0
    %772 = vmatprep.subr.mxu0 0.0
    %773 = vmatpush1.msra.mxu0 0.0
    %774 = vmatprep.subr.mxu0 0.0
    %775 = vmatpush1.msra.mxu0 0.0
    %776 = vmatprep.subr.mxu0 0.0
    %777 = vmatpush1.msra.mxu0 0.0
    %778 = vmatprep.subr.mxu0 0.0
    %779 = vmatpush1.msra.mxu0 0.0
    %780 = vmatprep.subr.mxu0 0.0
    %781 = vmatpush1.msra.mxu0 0.0
    %782 = vmatprep.subr.mxu0 0.0
    %783 = vmatpush1.msra.mxu0 0.0
    %784 = vmatprep.subr.mxu0 0.0
    %785 = vmatpush1.msra.mxu0 0.0
    %786 = vmatprep.subr.mxu0 0.0
    %787 = vmatpush1.msra.mxu0 0.0
    %788 = vmatprep.subr.mxu0 0.0
    %789 = vmatpush1.msra.mxu0 0.0
    %790 = vmatprep.subr.mxu0 0.0
    %791 = vmatpush1.msra.mxu0 0.0
    %792 = vmatprep.mubr.f32.mxu0 0.0
    %793 = vmatmul.mubr.f32.gmra.mrb[0].mxu0 %v723
    %v794 = vpop.f32.mrb[0].mxu0
    %v795 = vadd.f32 %v720, %v794
    %v796 = vpop.f32.mrb[0].mxu0
    %797 = vmatprep.mubr.f32.mxu0 0.0
    %798 = vmatmul.mubr.f32.gmra.mrb[0].mxu0 %v726
    %v799 = vpop.f32.mrb[0].mxu0
    %v800 = vadd.f32 %v720, %v799
    %v801 = vpop.f32.mrb[0].mxu0
    %802 = vdwg.mxu0
    %v803 = vadd.f32 %v149, %v795
    %v804 = vadd.f32 %v150, %v800
    %v805 = vld [vmem:[#allocation10] sm:$0x1]
    %v806 = vld [vmem:[#allocation11] sm:$0x1]
    %v807 = vsel %vm153, %v803, 0.0
    %808 = vadd.xlane.f32.xlu0 %v807
    %v809 = vpop.xlane.xlu0 %808
    %v810 = vsel %vm153, %v804, 0.0
    %811 = vadd.xlane.f32.xlu0 %v810
    %v812 = vpop.xlane.xlu0 %811
    %v813 = vmul.f32 %v809, %v160
    %v814 = vmul.f32 %v812, %v160
    %v815 = vsub.f32 %v803, %v813
    %v816 = vsub.f32 %v804, %v814
    %v817 = vmul.f32 %v815, %v815
    %v818 = vmul.f32 %v816, %v816
    %v819 = vsel %vm153, %v817, 0.0
    %820 = vadd.xlane.f32.xlu0 %v819
    %v821 = vpop.xlane.xlu0 %820
    %v822 = vsel %vm153, %v818, 0.0
    %823 = vadd.xlane.f32.xlu0 %v822
    %v824 = vpop.xlane.xlu0 %823
    %v825 = vmul.f32 %v821, %v160
    %v826 = vmul.f32 %v824, %v160
    %v827 = vadd.f32 %v825, 1e-05
    %v828 = vadd.f32 %v826, 1e-05
    %v829 = vrsqrt.pop %v827
    %v830 = vrsqrt.pop %v828
    %v831 = vmul.f32 %v815, %v829
    %v832 = vmul.f32 %v816, %v830
    %v834 = vlaneseq
    %v835 = vshrl.u32 %v834, 7
    %v836 = vsub.s32 0, %v835
    %v837 = vrot.slane %v805, %v836
    %v839 = vmul.f32 %v831, %v837
    %v840 = vmul.f32 %v832, %v837
    %v842 = vlaneseq
    %v843 = vshrl.u32 %v842, 7
    %v844 = vsub.s32 0, %v843
    %v845 = vrot.slane %v806, %v844
    %v847 = vadd.f32 %v839, %v845
    %v848 = vadd.f32 %v840, %v845
    %v849 = vld [vmem:[%s9] sm:$0xff]
    %v850 = vld [vmem:[%s9 + $0x8] sm:$0xff]
    %v851 = vld [vmem:[%s9 + $0x10] sm:$0xff]
    %v852 = vld [vmem:[%s9 + $0x18] sm:$0xff]
    %v853 = vld [vmem:[#allocation13] sm:$0x1]
    %v855 = vlaneseq
    %v856 = vshrl.u32 %v855, 7
    %v857 = vsub.s32 0, %v856
    %v858 = vrot.slane %v853, %v857
    %v861 = vsel %vm153, %v847, 0
    %v864 = vsel %vm153, %v848, 0
    %866 = vmatprep.subr.mxu0 0.0
    %867 = vmatpush1.msra.mxu0 %v849
    %868 = vmatprep.subr.mxu0 0.0
    %869 = vmatpush1.msra.mxu0 %v850
    %870 = vmatprep.subr.mxu0 0.0
    %871 = vmatpush1.msra.mxu0 %v851
    %872 = vmatprep.subr.mxu0 0.0
    %873 = vmatpush1.msra.mxu0 %v852
    %874 = vmatprep.subr.mxu0 0.0
    %875 = vmatpush1.msra.mxu0 0.0
    %876 = vmatprep.subr.mxu0 0.0
    %877 = vmatpush1.msra.mxu0 0.0
    %878 = vmatprep.subr.mxu0 0.0
    %879 = vmatpush1.msra.mxu0 0.0
    %880 = vmatprep.subr.mxu0 0.0
    %881 = vmatpush1.msra.mxu0 0.0
    %882 = vmatprep.subr.mxu0 0.0
    %883 = vmatpush1.msra.mxu0 0.0
    %884 = vmatprep.subr.mxu0 0.0
    %885 = vmatpush1.msra.mxu0 0.0
    %886 = vmatprep.subr.mxu0 0.0
    %887 = vmatpush1.msra.mxu0 0.0
    %888 = vmatprep.subr.mxu0 0.0
    %889 = vmatpush1.msra.mxu0 0.0
    %890 = vmatprep.subr.mxu0 0.0
    %891 = vmatpush1.msra.mxu0 0.0
    %892 = vmatprep.subr.mxu0 0.0
    %893 = vmatpush1.msra.mxu0 0.0
    %894 = vmatprep.subr.mxu0 0.0
    %895 = vmatpush1.msra.mxu0 0.0
    %896 = vmatprep.subr.mxu0 0.0
    %897 = vmatpush1.msra.mxu0 0.0
    %898 = vmatprep.subr.mxu0 0.0
    %899 = vmatpush1.msra.mxu0 0.0
    %900 = vmatprep.subr.mxu0 0.0
    %901 = vmatpush1.msra.mxu0 0.0
    %902 = vmatprep.subr.mxu0 0.0
    %903 = vmatpush1.msra.mxu0 0.0
    %904 = vmatprep.subr.mxu0 0.0
    %905 = vmatpush1.msra.mxu0 0.0
    %906 = vmatprep.subr.mxu0 0.0
    %907 = vmatpush1.msra.mxu0 0.0
    %908 = vmatprep.subr.mxu0 0.0
    %909 = vmatpush1.msra.mxu0 0.0
    %910 = vmatprep.subr.mxu0 0.0
    %911 = vmatpush1.msra.mxu0 0.0
    %912 = vmatprep.subr.mxu0 0.0
    %913 = vmatpush1.msra.mxu0 0.0
    %914 = vmatprep.subr.mxu0 0.0
    %915 = vmatpush1.msra.mxu0 0.0
    %916 = vmatprep.subr.mxu0 0.0
    %917 = vmatpush1.msra.mxu0 0.0
    %918 = vmatprep.subr.mxu0 0.0
    %919 = vmatpush1.msra.mxu0 0.0
    %920 = vmatprep.subr.mxu0 0.0
    %921 = vmatpush1.msra.mxu0 0.0
    %922 = vmatprep.subr.mxu0 0.0
    %923 = vmatpush1.msra.mxu0 0.0
    %924 = vmatprep.subr.mxu0 0.0
    %925 = vmatpush1.msra.mxu0 0.0
    %926 = vmatprep.subr.mxu0 0.0
    %927 = vmatpush1.msra.mxu0 0.0
    %928 = vmatprep.subr.mxu0 0.0
    %929 = vmatpush1.msra.mxu0 0.0
    %930 = vmatprep.mubr.f32.mxu0 0.0
    %931 = vmatmul.mubr.f32.gmra.mrb[0].mxu0 %v861
    %v932 = vpop.f32.mrb[0].mxu0
    %v933 = vadd.f32 %v858, %v932
    %v934 = vpop.f32.mrb[0].mxu0
    %935 = vmatprep.mubr.f32.mxu0 0.0
    %936 = vmatmul.mubr.f32.gmra.mrb[0].mxu0 %v864
    %v937 = vpop.f32.mrb[0].mxu0
    %v938 = vadd.f32 %v858, %v937
    %v939 = vpop.f32.mrb[0].mxu0
    %940 = vdwg.mxu0
    %v941 = vmul.f32 %v933, 0.5
    %v942 = vmul.f32 %v938, 0.5
    %v943 = vmul.f32 %v933, 0.044715
    %v944 = vmul.f32 %v938, 0.044715
    %v945 = vmul.f32 %v943, %v933
    %v946 = vmul.f32 %v944, %v938
    %v947 = vmul.f32 %v945, %v933
    %v948 = vmul.f32 %v946, %v938
    %v949 = vadd.f32 %v933, %v947
    %v950 = vadd.f32 %v938, %v948
    %v951 = vmul.f32 %v949, 0.7978846
    %v952 = vmul.f32 %v950, 0.7978846
    %v953 = vtanh.pop %v951
    %v954 = vtanh.pop %v952
    %v955 = vadd.f32 %v953, 1.0
    %v956 = vadd.f32 %v954, 1.0
    %v957 = vmul.f32 %v941, %v955
    %v958 = vmul.f32 %v942, %v956
    %v959 = vld [vmem:[%s11] sm:$0xff]
    %v960 = vld [vmem:[%s11 + $0x8] sm:$0xff]
    %v961 = vld [vmem:[%s11 + $0x10] sm:$0xff]
    %v962 = vld [vmem:[%s11 + $0x18] sm:$0xff]
    %v963 = vld [vmem:[%s11 + $0x20] sm:$0xff]
    %v964 = vld [vmem:[%s11 + $0x28] sm:$0xff]
    %v965 = vld [vmem:[%s11 + $0x30] sm:$0xff]
    %v966 = vld [vmem:[%s11 + $0x38] sm:$0xff]
    %v967 = vld [vmem:[#allocation14] sm:$0x1]
    %v969 = vlaneseq
    %v970 = vshrl.u32 %v969, 7
    %v971 = vsub.s32 0, %v970
    %v972 = vrot.slane %v967, %v971
    %v975 = vsel %vm492, %v957, 0
    %v978 = vsel %vm492, %v958, 0
    %980 = vmatprep.subr.mxu0 0.0
    %981 = vmatpush1.msra.mxu0 %v959
    %982 = vmatprep.subr.mxu0 0.0
    %983 = vmatpush1.msra.mxu0 %v960
    %984 = vmatprep.subr.mxu0 0.0
    %985 = vmatpush1.msra.mxu0 %v961
    %986 = vmatprep.subr.mxu0 0.0
    %987 = vmatpush1.msra.mxu0 %v962
    %988 = vmatprep.subr.mxu0 0.0
    %989 = vmatpush1.msra.mxu0 %v963
    %990 = vmatprep.subr.mxu0 0.0
    %991 = vmatpush1.msra.mxu0 %v964
    %992 = vmatprep.subr.mxu0 0.0
    %993 = vmatpush1.msra.mxu0 %v965
    %994 = vmatprep.subr.mxu0 0.0
    %995 = vmatpush1.msra.mxu0 %v966
    %996 = vmatprep.subr.mxu0 0.0
    %997 = vmatpush1.msra.mxu0 0.0
    %998 = vmatprep.subr.mxu0 0.0
    %999 = vmatpush1.msra.mxu0 0.0
    %1000 = vmatprep.subr.mxu0 0.0
    %1001 = vmatpush1.msra.mxu0 0.0
    %1002 = vmatprep.subr.mxu0 0.0
    %1003 = vmatpush1.msra.mxu0 0.0
    %1004 = vmatprep.subr.mxu0 0.0
    %1005 = vmatpush1.msra.mxu0 0.0
    %1006 = vmatprep.subr.mxu0 0.0
    %1007 = vmatpush1.msra.mxu0 0.0
    %1008 = vmatprep.subr.mxu0 0.0
    %1009 = vmatpush1.msra.mxu0 0.0
    %1010 = vmatprep.subr.mxu0 0.0
    %1011 = vmatpush1.msra.mxu0 0.0
    %1012 = vmatprep.subr.mxu0 0.0
    %1013 = vmatpush1.msra.mxu0 0.0
    %1014 = vmatprep.subr.mxu0 0.0
    %1015 = vmatpush1.msra.mxu0 0.0
    %1016 = vmatprep.subr.mxu0 0.0
    %1017 = vmatpush1.msra.mxu0 0.0
    %1018 = vmatprep.subr.mxu0 0.0
    %1019 = vmatpush1.msra.mxu0 0.0
    %1020 = vmatprep.subr.mxu0 0.0
    %1021 = vmatpush1.msra.mxu0 0.0
    %1022 = vmatprep.subr.mxu0 0.0
    %1023 = vmatpush1.msra.mxu0 0.0
    %1024 = vmatprep.subr.mxu0 0.0
    %1025 = vmatpush1.msra.mxu0 0.0
    %1026 = vmatprep.subr.mxu0 0.0
    %1027 = vmatpush1.msra.mxu0 0.0
    %1028 = vmatprep.subr.mxu0 0.0
    %1029 = vmatpush1.msra.mxu0 0.0
    %1030 = vmatprep.subr.mxu0 0.0
    %1031 = vmatpush1.msra.mxu0 0.0
    %1032 = vmatprep.subr.mxu0 0.0
    %1033 = vmatpush1.msra.mxu0 0.0
    %1034 = vmatprep.subr.mxu0 0.0
    %1035 = vmatpush1.msra.mxu0 0.0
    %1036 = vmatprep.subr.mxu0 0.0
    %1037 = vmatpush1.msra.mxu0 0.0
    %1038 = vmatprep.subr.mxu0 0.0
    %1039 = vmatpush1.msra.mxu0 0.0
    %1040 = vmatprep.subr.mxu0 0.0
    %1041 = vmatpush1.msra.mxu0 0.0
    %1042 = vmatprep.subr.mxu0 0.0
    %1043 = vmatpush1.msra.mxu0 0.0
    %1044 = vmatprep.mubr.f32.mxu0 0.0
    %1045 = vmatmul.mubr.f32.gmra.mrb[0].mxu0 %v975
    %v1046 = vpop.f32.mrb[0].mxu0
    %v1047 = vadd.f32 %v972, %v1046
    %v1048 = vpop.f32.mrb[0].mxu0
    %1049 = vmatprep.mubr.f32.mxu0 0.0
    %1050 = vmatmul.mubr.f32.gmra.mrb[0].mxu0 %v978
    %v1051 = vpop.f32.mrb[0].mxu0
    %v1052 = vadd.f32 %v972, %v1051
    %v1053 = vpop.f32.mrb[0].mxu0
    %1054 = vdwg.mxu0
    %v1055 = vadd.f32 %v803, %v1047
    %v1056 = vadd.f32 %v804, %v1052
    %1057 = vst.msk [vmem:[#allocation16] sm:$0xff] %vm153, %v1055
    %1058 = vst.msk [vmem:[#allocation16 + $0x8] sm:$0xff] %vm153, %v1056
    // Predicated region
    $region98: #{gpt_transformer_block.1} parent=1 // pred_check
      _
    $region99: #{gpt_transformer_block.1} parent=1 // pred_check_branch
      %1060 = sbr.rel (0) target = $region101
    $region100: #{gpt_transformer_block.1} parent=1 // pred_region
      %s1062 = ssub.s32 256, 256
      %1063 = vsyncadd [#allocation4], %s1062
      %s1064 = sshll.u32 [#allocation16], 4
      %s1065 = int_to_ptr.vmem [resolvable:$true] %s1064
      %1070 = dma.vmem_to_hbm [thread:$0]  %s1065, 256, %s16, [#allocation4], 128, 128, 8
    $region101: #{gpt_transformer_block.1} parent=1 // pred_fallthru
      _
    // Predicated region
    $region102: #{gpt_transformer_block.1} parent=1 // pred_check
      _
    $region103: #{gpt_transformer_block.1} parent=1 // pred_check_branch
      %1072 = sbr.rel (0) target = $region105
    $region104: #{gpt_transformer_block.1} parent=1 // pred_region
      %1073 = dma.done [#allocation4], 256
    $region105: #{gpt_transformer_block.1} parent=1 // pred_fallthru
      _
    %1074 = vsyncpa [#allocation3], 1
    %1075 = vsyncpa [#allocation6], 1
    %1076 = vsyncpa [#allocation9], 1
    %1077 = vsyncpa [#allocation12], 1
    %1078 = vsyncpa [#allocation15], 1
    %1079 = vsyncpa [#allocation4], 1

</llo_original>
